<compile_context>
chip_gen: v7x
topology: tpu7x:2x2x1
jax: 0.10.0
libtpu: 0.0.40
codegen_flags: <defaults>
</compile_context>

<pallas_src>
import jax
import jax.numpy as jnp
from jax.experimental import pallas as pl
from jax.experimental.pallas import tpu as pltpu


def _round_up(a, m):
    return ((a + m - 1) // m) * m


def _largest_tile(total, cap):
    """Largest multiple of 128 dividing `total` (itself a multiple of 128),
    bounded by `cap`.  For awkward widths with no divisor >= 256 under the cap
    (e.g. 640, 896) prefer the full lane-dense width while it stays small."""
    c = (min(cap, total) // 128) * 128
    while c >= 128 and total % c != 0:
        c -= 128
    if c < 256 and total <= 1024:
        return total
    return c


def _pick_tm(m, cap=512):
    """Largest row tile (512..16) whose M-padding waste stays small, avoiding
    up to ~2x phantom MXU work for M just above a tile multiple."""
    for c in (512, 256, 128, 64, 32, 16):
        if c > cap:
            continue
        pad = _round_up(m, c) - m
        if pad == 0 or pad <= m // 8:
            return c
    return 16


def _vmem_limit(*buffers):
    """Double-buffered working-set estimate (+ headroom).  Clipped so it is
    safe on every generation (v5e/v6e: 128 MiB physical, v7x: 64 MiB)."""
    working = 0
    for shape, itemsize in buffers:
        n = 1
        for s in shape:
            n *= int(s)
        working += 2 * n * itemsize
    return int(min(max(working + (working >> 2) + (4 << 20), 24 << 20), 56 << 20))


# ----------------------------- kernel bodies ------------------------------ #

def _fused_kernel(x_ref, w_ref, b_ref, o_ref):
    # K folded AND the output tile covers the full lane width: the matmul LHS
    # tile is also the residual tile, so x is streamed exactly once per block.
    x = x_ref[...]
    o_ref[...] = (jnp.dot(x, w_ref[...], preferred_element_type=jnp.float32)
                  + b_ref[...] + x.astype(jnp.float32))


def _nok_kernel(x_ref, w_ref, b_ref, xres_ref, o_ref):
    # K folded (tk == Dp) but output tiled along N: one MXU pass per (i, j)
    # tile; bias + residual fused in the same step.  No accumulator, no pl.when.
    o_ref[...] = (jnp.dot(x_ref[...], w_ref[...],
                          preferred_element_type=jnp.float32)
                  + b_ref[...] + xres_ref[...].astype(jnp.float32))


def _ktiled_kernel(x_ref, w_ref, b_ref, xres_ref, o_ref):
    # K-tiled path for very wide hidden dims.  Accumulate directly into the
    # resident f32 output block (no scratch accumulator, no epilogue copy);
    # bias + residual are folded into the k == 0 init.
    @pl.when(pl.program_id(2) == 0)
    def _init():
        o_ref[...] = b_ref[...] + xres_ref[...].astype(jnp.float32)

    o_ref[...] += jnp.dot(x_ref[...], w_ref[...],
                          preferred_element_type=jnp.float32)


# ------------------------------- wrapper ---------------------------------- #

def make_residual_linear(w, b, *, tm=512, tn_cap=512, tk_cap=512,
                         fold_k_max=2048):
    """Builds fn(x) = Linear(x) + x as a fused Pallas TPU kernel.

    The weight pad + bf16 cast happen ONCE here (hoisted out of the per-call
    path).  x: (B, N, D) f32;  w: (D, D) f32 applied as x @ w;  b: (D,) f32.
    """
    D = int(w.shape[0])
    assert w.shape == (D, D) and b.shape == (D,)
    Dp = _round_up(D, 128)

    tn = _largest_tile(Dp, tn_cap)
    fold_k = Dp <= fold_k_max                       # whole K in one MXU pass
    tk = Dp if fold_k else _largest_tile(Dp, tk_cap)

    # Prepared once; re-padding / re-casting the weight per call is pure waste.
    w_bf16 = jnp.pad(w, ((0, Dp - D), (0, Dp - D))).astype(jnp.bfloat16)
    b_pad = jnp.pad(b, (0, Dp - D)).reshape(1, Dp).astype(jnp.float32)

    def apply(x):
        B, N, Dx = x.shape
        assert Dx == D
        M = B * N

        tm_eff = _pick_tm(M, cap=tm)
        Mp = _round_up(M, tm_eff)

        # v7x: 2 TensorCores share the parallel grid axes; avoid a single
        # parallel block when the row axis can be split cheaply.
        if (Mp // tm_eff) * (Dp // tn) == 1 and tm_eff >= 32:
            tm_eff //= 2

        # Single padded bf16 copy of x feeds BOTH the matmul LHS and the
        # residual stream (no second f32 padded copy).
        x_bf16 = jnp.pad(x.reshape(M, D).astype(jnp.bfloat16),
                         ((0, Mp - M), (0, Dp - D)))

        if fold_k and tn == Dp:
            vmem = _vmem_limit(((tm_eff, Dp), 2), ((Dp, Dp), 2),
                               ((1, Dp), 4), ((tm_eff, Dp), 4))
            out = pl.pallas_call(
                _fused_kernel,
                out_shape=jax.ShapeDtypeStruct((Mp, Dp), jnp.float32),
                grid_spec=pltpu.PrefetchScalarGridSpec(
                    num_scalar_prefetch=0,
                    grid=(Mp // tm_eff,),
                    in_specs=[
                        pl.BlockSpec((tm_eff, Dp), lambda i: (i, 0)),   # x
                        pl.BlockSpec((Dp, Dp), lambda i: (0, 0)),       # weight
                        pl.BlockSpec((1, Dp), lambda i: (0, 0)),        # bias
                    ],
                    out_specs=pl.BlockSpec((tm_eff, Dp), lambda i: (i, 0)),
                ),
                compiler_params=pltpu.CompilerParams(
                    dimension_semantics=("parallel",),
                    vmem_limit_bytes=vmem,
                ),
            )(x_bf16, w_bf16, b_pad)

        elif fold_k:
            vmem = _vmem_limit(((tm_eff, tk), 2), ((tk, tn), 2),
                               ((1, tn), 4), ((tm_eff, tn), 2),
                               ((tm_eff, tn), 4))
            out = pl.pallas_call(
                _nok_kernel,
                out_shape=jax.ShapeDtypeStruct((Mp, Dp), jnp.float32),
                grid_spec=pltpu.PrefetchScalarGridSpec(
                    num_scalar_prefetch=0,
                    grid=(Mp // tm_eff, Dp // tn),
                    in_specs=[
                        pl.BlockSpec((tm_eff, tk), lambda i, j: (i, 0)),  # matmul LHS
                        pl.BlockSpec((tk, tn), lambda i, j: (0, j)),      # weight
                        pl.BlockSpec((1, tn), lambda i, j: (0, j)),       # bias
                        pl.BlockSpec((tm_eff, tn), lambda i, j: (i, j)),  # residual
                    ],
                    out_specs=pl.BlockSpec((tm_eff, tn), lambda i, j: (i, j)),
                ),
                compiler_params=pltpu.CompilerParams(
                    dimension_semantics=("parallel", "parallel"),
                    vmem_limit_bytes=vmem,
                ),
            )(x_bf16, w_bf16, b_pad, x_bf16)

        else:
            # If profiling ever shows exposed weight DMA at k-step boundaries,
            # add pipeline_mode=pl.Buffered(3) to the weight BlockSpec below.
            vmem = _vmem_limit(((tm_eff, tk), 2), ((tk, tn), 2),
                               ((1, tn), 4), ((tm_eff, tn), 2),
                               ((tm_eff, tn), 4))
            out = pl.pallas_call(
                _ktiled_kernel,
                out_shape=jax.ShapeDtypeStruct((Mp, Dp), jnp.float32),
                grid_spec=pltpu.PrefetchScalarGridSpec(
                    num_scalar_prefetch=0,
                    grid=(Mp // tm_eff, Dp // tn, Dp // tk),
                    in_specs=[
                        pl.BlockSpec((tm_eff, tk), lambda i, j, k: (i, k)),
                        pl.BlockSpec((tk, tn), lambda i, j, k: (k, j)),
                        pl.BlockSpec((1, tn), lambda i, j, k: (0, j)),
                        pl.BlockSpec((tm_eff, tn), lambda i, j, k: (i, j)),
                    ],
                    out_specs=pl.BlockSpec((tm_eff, tn), lambda i, j, k: (i, j)),
                ),
                compiler_params=pltpu.CompilerParams(
                    dimension_semantics=("parallel", "parallel", "arbitrary"),
                    vmem_limit_bytes=vmem,
                ),
            )(x_bf16, w_bf16, b_pad, x_bf16)

        return out[:M, :D].reshape(B, N, D)

    return jax.jit(apply)


if __name__ == "__main__":
    # Small shapes consistent with the module: batch=2, seq=8, hidden=32
    B, N, D = 2, 8, 32
    key = jax.random.PRNGKey(0)
    kx, kw, kb = jax.random.split(key, 3)

    x = jax.random.normal(kx, (B, N, D), dtype=jnp.float32)
    # Deterministic in-script "parameters" for the wrapped fn (Linear D->D).
    w = jax.random.normal(kw, (D, D), dtype=jnp.float32) * (1.0 / jnp.sqrt(D))
    b = jax.random.normal(kb, (D,), dtype=jnp.float32) * 0.01

    residual_fn = make_residual_linear(w, b)
    out = residual_fn(x)
    jax.block_until_ready(out)

    # Reference: fn(x) + x in plain JAX (f32); kernel uses bf16 matmul inputs
    # and a bf16 residual stream, so use a loosened tolerance.
    ref = jnp.einsum("bnd,de->bne", x, w) + b + x
    assert out.shape == (B, N, D)
    assert jnp.allclose(out, ref, atol=5e-2, rtol=5e-2), \
        float(jnp.max(jnp.abs(out - ref)))

    print("KERNEL_OK")
</pallas_src>

<mosaic_0001>
module attributes {stable_mosaic.version = 11 : i64} {
  func.func @_fused_kernel(%arg0: i32, %arg1: memref<16x128xbf16, #tpu.memory_space<vmem>>, %arg2: memref<128x128xbf16, #tpu.memory_space<vmem>>, %arg3: memref<1x128xf32, #tpu.memory_space<vmem>>, %arg4: memref<16x128xf32, #tpu.memory_space<vmem>>) attributes {dimension_semantics = [#tpu.dimension_semantics<parallel>], iteration_bounds = array<i64: 1>, scalar_prefetch = 0 : i64, scratch_operands = 0 : i64, tpu.core_type = #tpu.core_type<tc>, window_params = [{transform_indices = @transform_0, window_bounds = array<i64: 16, 128>}, {pipeline_mode = #tpu.pipeline_mode<synchronous>, transform_indices = @transform_1, window_bounds = array<i64: 128, 128>}, {pipeline_mode = #tpu.pipeline_mode<synchronous>, transform_indices = @transform_2, window_bounds = array<i64: 1, 128>}, {transform_indices = @transform_3, window_bounds = array<i64: 16, 128>}]} {
    %c0 = arith.constant 0 : index
    %c0_0 = arith.constant 0 : index
    %0 = vector.load %arg1[%c0, %c0_0] : memref<16x128xbf16, #tpu.memory_space<vmem>>, vector<16x128xbf16>
    %c0_1 = arith.constant 0 : index
    %c0_2 = arith.constant 0 : index
    %1 = vector.load %arg2[%c0_1, %c0_2] : memref<128x128xbf16, #tpu.memory_space<vmem>>, vector<128x128xbf16>
    %cst = arith.constant dense<0.000000e+00> : vector<16x128xf32>
    %2 = tpu.matmul %0, %1, %cst {dimension_numbers = #tpu.dot_dimension_numbers<[1], [0], [0], [1], [0, 0, 1, 1], [], []>} : vector<16x128xbf16>, vector<128x128xbf16>, vector<16x128xf32> -> vector<16x128xf32>
    %c0_3 = arith.constant 0 : index
    %c0_4 = arith.constant 0 : index
    %3 = vector.load %arg3[%c0_3, %c0_4] : memref<1x128xf32, #tpu.memory_space<vmem>>, vector<1x128xf32>
    %4 = vector.broadcast %3 : vector<1x128xf32> to vector<16x128xf32>
    %5 = arith.addf %2, %4 : vector<16x128xf32>
    %6 = arith.extf %0 : vector<16x128xbf16> to vector<16x128xf32>
    %7 = arith.addf %5, %6 : vector<16x128xf32>
    %c0_5 = arith.constant 0 : index
    %c0_6 = arith.constant 0 : index
    %8 = vector.load %arg4[%c0_5, %c0_6] : memref<16x128xf32, #tpu.memory_space<vmem>>, vector<16x128xf32>
    tpu.vector_store %arg4[%c0_5, %c0_6], %7 {strides = array<i32>} : memref<16x128xf32, #tpu.memory_space<vmem>>, vector<16x128xf32>,
    return
  }
  func.func @transform_0(%arg0: i32) -> (i32, i32) {
    %c0_i32 = arith.constant 0 : i32
    %c0_i32_0 = arith.constant 0 : i32
    return %arg0, %c0_i32 : i32, i32
  }
  func.func @transform_1(%arg0: i32) -> (i32, i32) {
    %c0_i32 = arith.constant 0 : i32
    %c0_i32_0 = arith.constant 0 : i32
    %c0_i32_1 = arith.constant 0 : i32
    return %c0_i32, %c0_i32_0 : i32, i32
  }
  func.func @transform_2(%arg0: i32) -> (i32, i32) {
    %c0_i32 = arith.constant 0 : i32
    %c0_i32_0 = arith.constant 0 : i32
    %c0_i32_1 = arith.constant 0 : i32
    return %c0_i32, %c0_i32_0 : i32, i32
  }
  func.func @transform_3(%arg0: i32) -> (i32, i32) {
    %c0_i32 = arith.constant 0 : i32
    %c0_i32_0 = arith.constant 0 : i32
    return %arg0, %c0_i32 : i32, i32
  }
}

</mosaic_0001>

<llo_original>
// kernel: apply.1
$region0: #{apply.1}
  #allocation0 [shape = 'u32[]', space=smem, size = 0x4, offset = 0x4, fixed_abs, tag = 'smem constant byte address 0x4 - core index']
  #allocation1 [shape = 'u32[144,128]{1,0:T(1,128)}', space=vmem, size = 0x12000, scoped, tag = 'internal scratch']
  %s0 = inlined_call_operand.vmem [shape: bf16[16,128], index: 0, kind: input, shape index: {}]
  %s1 = inlined_call_operand.hbm [shape: bf16[128,128], index: 1, kind: input, shape index: {}]
  %s2 = inlined_call_operand.vmem [shape: f32[1,128], index: 2, kind: input, shape index: {}]
  %s3 = inlined_call_operand.vmem [shape: f32[16,128], index: 3, kind: output, shape index: {}]
  %s4 = sld [smem:[#allocation0]]
  $region26: #{apply.1} parent=0
    _
  %s6 = ssub.s32 1, %s4
  %s7 = scalar_select 0, %s6, %s4
  $region1: #{apply.1} parent=0
    #allocation2 [shape = 'u8[32768]{0}', space=vmem, size = 0x8000, scoped, tag = 'input window, operand 1, single buffered']
    #allocation3 [shape = 's32[1]{0}', space=sflag, size = 0x4, scoped, tag = 'scoped memory for apply.1']
    %8 = vsyncpa [#allocation3], 0
    // Predicated region
    $region2: #{apply.1} parent=1 // pred_check
      _
    $region3: #{apply.1} parent=1 // pred_check_branch
      %10 = sbr.rel (0) target = $region5
    $region4: #{apply.1} parent=1 // pred_region
      _
    $region5: #{apply.1} parent=1 // pred_fallthru
      _
    // Predicated region
    $region6: #{apply.1} parent=1 // pred_check
      _
    $region7: #{apply.1} parent=1 // pred_check_branch
      %12 = sbr.rel (0) target = $region9
    $region8: #{apply.1} parent=1 // pred_region
      %s14 = ssub.s32 1024, 1024
      %15 = vsyncadd [#allocation3], %s14
      %s16 = sshll.u32 [#allocation2], 4
      %s17 = int_to_ptr.vmem [resolvable:$true] %s16
      %22 = dma.hbm_to_vmem [thread:$0]  %s1, 1024, %s17, [#allocation3], 64, 64, 4
    $region9: #{apply.1} parent=1 // pred_fallthru
      _
    // Predicated region
    $region10: #{apply.1} parent=1 // pred_check
      _
    $region11: #{apply.1} parent=1 // pred_check_branch
      %24 = sbr.rel (0) target = $region13
    $region12: #{apply.1} parent=1 // pred_region
      _
    $region13: #{apply.1} parent=1 // pred_fallthru
      _
    // Predicated region
    $region14: #{apply.1} parent=1 // pred_check
      _
    $region15: #{apply.1} parent=1 // pred_check_branch
      %26 = sbr.rel (0) target = $region17
    $region16: #{apply.1} parent=1 // pred_region
      %27 = dma.done [#allocation3], 1024
    $region17: #{apply.1} parent=1 // pred_fallthru
      _
    %v29 = vld [vmem:[%s0] sm:$0xf]
    %v30 = vld [vmem:[%s0 + $0x4] sm:$0xf]
    %v31 = vld [vmem:[#allocation2] sm:$0xf]
    %v32 = vld [vmem:[#allocation2 + $0x4] sm:$0xf]
    %v33 = vld [vmem:[#allocation2 + $0x8] sm:$0xf]
    %v34 = vld [vmem:[#allocation2 + $0xc] sm:$0xf]
    %v35 = vld [vmem:[#allocation2 + $0x10] sm:$0xf]
    %v36 = vld [vmem:[#allocation2 + $0x14] sm:$0xf]
    %v37 = vld [vmem:[#allocation2 + $0x18] sm:$0xf]
    %v38 = vld [vmem:[#allocation2 + $0x1c] sm:$0xf]
    %v39 = vld [vmem:[#allocation2 + $0x20] sm:$0xf]
    %v40 = vld [vmem:[#allocation2 + $0x24] sm:$0xf]
    %v41 = vld [vmem:[#allocation2 + $0x28] sm:$0xf]
    %v42 = vld [vmem:[#allocation2 + $0x2c] sm:$0xf]
    %v43 = vld [vmem:[#allocation2 + $0x30] sm:$0xf]
    %v44 = vld [vmem:[#allocation2 + $0x34] sm:$0xf]
    %v45 = vld [vmem:[#allocation2 + $0x38] sm:$0xf]
    %v46 = vld [vmem:[#allocation2 + $0x3c] sm:$0xf]
    %v47 = vld [vmem:[%s2] sm:$0x1]
    %v49 = vlaneseq
    %v50 = vshrl.u32 %v49, 7
    %v51 = vsub.s32 0, %v50
    %v52 = vrot.slane %v47, %v51
    %v56 = vunpack.c.l.b16 %v29
    %v57 = vunpack.c.l.b16 %v30
    %v58 = vpack.c.b16 %v57, %v56
    %v76 = vunpack.c.l.b16 %v31
    %v77 = vunpack.c.l.b16 %v32
    %v78 = vunpack.c.l.b16 %v33
    %v79 = vunpack.c.l.b16 %v34
    %v80 = vunpack.c.l.b16 %v35
    %v81 = vunpack.c.l.b16 %v36
    %v82 = vunpack.c.l.b16 %v37
    %v83 = vunpack.c.l.b16 %v38
    %v84 = vunpack.c.l.b16 %v39
    %v85 = vunpack.c.l.b16 %v40
    %v86 = vunpack.c.l.b16 %v41
    %v87 = vunpack.c.l.b16 %v42
    %v88 = vunpack.c.l.b16 %v43
    %v89 = vunpack.c.l.b16 %v44
    %v90 = vunpack.c.l.b16 %v45
    %v91 = vunpack.c.l.b16 %v46
    %v92 = vpack.c.b16 %v77, %v76
    %v93 = vpack.c.b16 %v79, %v78
    %v94 = vpack.c.b16 %v81, %v80
    %v95 = vpack.c.b16 %v83, %v82
    %v96 = vpack.c.b16 %v85, %v84
    %v97 = vpack.c.b16 %v87, %v86
    %v98 = vpack.c.b16 %v89, %v88
    %v99 = vpack.c.b16 %v91, %v90
    %108 = vmatprep.subr.bf16.mxu0 0
    %109 = vmatpush1.bf16.msra.mxu0 %v92
    %110 = vmatprep.subr.bf16.mxu0 0
    %111 = vmatpush1.bf16.msra.mxu0 %v93
    %112 = vmatprep.subr.bf16.mxu0 0
    %113 = vmatpush1.bf16.msra.mxu0 %v94
    %114 = vmatprep.subr.bf16.mxu0 0
    %115 = vmatpush1.bf16.msra.mxu0 %v95
    %116 = vmatprep.subr.bf16.mxu0 0
    %117 = vmatpush1.bf16.msra.mxu0 %v96
    %118 = vmatprep.subr.bf16.mxu0 0
    %119 = vmatpush1.bf16.msra.mxu0 %v97
    %120 = vmatprep.subr.bf16.mxu0 0
    %121 = vmatpush1.bf16.msra.mxu0 %v98
    %122 = vmatprep.subr.bf16.mxu0 0
    %123 = vmatpush1.bf16.msra.mxu0 %v99
    %124 = vmatprep.subr.bf16.mxu0 0
    %125 = vmatpush1.bf16.msra.mxu0 0
    %126 = vmatprep.subr.bf16.mxu0 0
    %127 = vmatpush1.bf16.msra.mxu0 0
    %128 = vmatprep.subr.bf16.mxu0 0
    %129 = vmatpush1.bf16.msra.mxu0 0
    %130 = vmatprep.subr.bf16.mxu0 0
    %131 = vmatpush1.bf16.msra.mxu0 0
    %132 = vmatprep.subr.bf16.mxu0 0
    %133 = vmatpush1.bf16.msra.mxu0 0
    %134 = vmatprep.subr.bf16.mxu0 0
    %135 = vmatpush1.bf16.msra.mxu0 0
    %136 = vmatprep.subr.bf16.mxu0 0
    %137 = vmatpush1.bf16.msra.mxu0 0
    %138 = vmatprep.subr.bf16.mxu0 0
    %139 = vmatpush1.bf16.msra.mxu0 0
    %140 = vmatprep.mubr.bf16.mxu0 0
    %141 = vmatmul.mubr.bf16.gmra.mrb[0].mxu0 %v58
    %v142 = vpop.f32.mrb[0].mxu0
    %v143 = vadd.f32 %v52, %v142
    %v144 = vpop.f32.mrb[0].mxu0
    %v145 = vpop.f32.mrb[0].mxu0
    %v146 = vadd.f32 %v52, %v145
    %v147 = vpop.f32.mrb[0].mxu0
    %148 = vdwg.mxu0
    %v149 = vunpack.c.l.bf16 %v29
    %v150 = vunpack.c.l.bf16 %v30
    %v151 = vadd.f32 %v143, %v149
    %v152 = vadd.f32 %v146, %v150
    %153 = vst [vmem:[%s3] sm:$0xff] %v151
    %154 = vst [vmem:[%s3 + $0x8] sm:$0xff] %v152
    // Predicated region
    $region18: #{apply.1} parent=1 // pred_check
      _
    $region19: #{apply.1} parent=1 // pred_check_branch
      %156 = sbr.rel (0) target = $region21
    $region20: #{apply.1} parent=1 // pred_region
      _
    $region21: #{apply.1} parent=1 // pred_fallthru
      _
    // Predicated region
    $region22: #{apply.1} parent=1 // pred_check
      _
    $region23: #{apply.1} parent=1 // pred_check_branch
      %158 = sbr.rel (0) target = $region25
    $region24: #{apply.1} parent=1 // pred_region
      _
    $region25: #{apply.1} parent=1 // pred_fallthru
      _
    %159 = vsyncpa [#allocation3], 1

</llo_original>
